<compile_context>
chip_gen: v7x
topology: tpu7x:2x2x1
jax: 0.10.0
libtpu: 0.0.40
codegen_flags: <defaults>
</compile_context>

<pallas_src>
import functools

import jax
import jax.numpy as jnp
from jax.experimental import pallas as pl
from jax.experimental.pallas import tpu as pltpu

_MIB = 1024 * 1024


def _round_up(x: int, m: int) -> int:
    return ((x + m - 1) // m) * m


def _physical_vmem_bytes() -> int:
    """Physical VMEM per TensorCore (fallback 64 MiB: safe on every generation)."""
    try:
        info = pltpu.get_tpu_info()
        v = int(getattr(info, "vmem_capacity_bytes", 0))
        if v > 0:
            return min(v, 128 * _MIB)
    except Exception:
        pass
    return 64 * _MIB


def _device_kind() -> str:
    try:
        return jax.devices()[0].device_kind.lower()
    except Exception:
        return ""


def _lane_multiple_for(dim: int) -> int:
    # v6e/v7x MXUs are 2x256x256 -> pad big feature dims to 256 for full tiles;
    # keep 128 on v5e (4x128x128) and for small dims (avoid wasted bandwidth).
    if dim >= 256:
        kind = _device_kind()
        if ("v6" in kind) or ("v7" in kind):
            return 256
    return 128


# ----------------------------------------------------------------------------
# Probe: is pipeline_mode=pl.Buffered(1) supported on this jax/libtpu?
# ----------------------------------------------------------------------------
def _probe_kernel(x_ref, o_ref):
    o_ref[...] = x_ref[...]


@functools.lru_cache(maxsize=1)
def _single_buffer_supported() -> bool:
    try:
        spec = pl.BlockSpec((8, 128), lambda i: (0, 0),
                            pipeline_mode=pl.Buffered(1))
        out = pl.pallas_call(
            _probe_kernel,
            out_shape=jax.ShapeDtypeStruct((8, 128), jnp.float32),
            grid=(2,),
            in_specs=[spec],
            out_specs=pl.BlockSpec((8, 128), lambda i: (0, 0)),
        )(jnp.zeros((8, 128), jnp.float32))
        jax.block_until_ready(out)
        return True
    except Exception:
        return False


def _resident_spec(shape, single_buffer: bool) -> pl.BlockSpec:
    # Constant index_map -> operand stays VMEM-resident across the batch grid.
    idx = lambda i: (0,) * len(shape)
    if single_buffer:
        return pl.BlockSpec(shape, idx, pipeline_mode=pl.Buffered(1))
    return pl.BlockSpec(shape, idx)


# ----------------------------------------------------------------------------
# Kernels
# ----------------------------------------------------------------------------
def _mlp_fused_kernel(x_ref, *refs, num_layers: int, act_dtype):
    """Fused MLP on one activation tile.

    refs layout: (w0, b0, w1, b1, ..., w_{L-1}, b_{L-1}, out_ref).
    Python loop is unrolled at trace time; intermediates live in vregs/VMEM.
    """
    o_ref = refs[-1]
    wb = refs[:-1]
    h = x_ref[...]                               # already in MXU operand dtype
    for i in range(num_layers):
        w = wb[2 * i][...]
        b = wb[2 * i + 1][...]                   # (1, Dout_p) f32, broadcasts
        h = jnp.dot(h, w, preferred_element_type=jnp.float32) + b
        if i < num_layers - 1:
            # ReLU between layers; carry bf16 activation into the next matmul
            # (halves intermediate vreg/VMEM pressure). No ReLU on last layer.
            h = jnp.maximum(h, 0.0).astype(act_dtype)
    o_ref[...] = h.astype(o_ref.dtype)


def _layer_kernel(x_ref, w_ref, b_ref, o_ref, acc_ref, *, relu: bool):
    """Streamed-weights fallback: one tiled matmul + bias (+ReLU) per layer."""
    @pl.when(pl.program_id(2) == 0)
    def _():
        acc_ref[...] = jnp.zeros_like(acc_ref)

    acc_ref[...] += jnp.dot(x_ref[...], w_ref[...],
                            preferred_element_type=jnp.float32)

    @pl.when(pl.program_id(2) == pl.num_programs(2) - 1)
    def _():
        r = acc_ref[...] + b_ref[...]
        if relu:
            r = jnp.maximum(r, 0.0)
        o_ref[...] = r.astype(o_ref.dtype)


# ----------------------------------------------------------------------------
# Parameter preparation (one-time pad + cast, outside the hot path)
# ----------------------------------------------------------------------------
def prepare_mlp_params(params, *, mxu_dtype=jnp.bfloat16):
    """Pad feature dims to lane-dense multiples and cast weights to the MXU
    operand dtype ONCE. Biases stay f32 (added to the f32 accumulator).

    Zero padding is exact: padded input columns hit zero weight rows, padded
    output columns have zero weight+bias, ReLU(0)=0, and the padded region is
    sliced off by the wrapper.
    """
    din = params[0][0].shape[0]
    out_dims = [w.shape[1] for w, _ in params]
    din_p = _round_up(din, _lane_multiple_for(din))
    out_dims_p = [_round_up(d, _lane_multiple_for(d)) for d in out_dims]
    w_dtype = mxu_dtype if mxu_dtype is not None else params[0][0].dtype

    padded = []
    prev_p = din_p
    for (w, b), d_out_p in zip(params, out_dims_p):
        n_in, n_out = w.shape
        w_p = (jnp.zeros((prev_p, d_out_p), w_dtype)
               .at[:n_in, :n_out].set(w.astype(w_dtype)))
        b_p = (jnp.zeros((1, d_out_p), jnp.float32)
               .at[0, :n_out].set(b.astype(jnp.float32)))
        padded.append((w_p, b_p))
        prev_p = d_out_p

    meta = dict(din=din, din_p=din_p, dout=out_dims[-1],
                out_dims_p=tuple(out_dims_p), act_dtype=w_dtype)
    return padded, meta


def _fused_vmem_bytes(tm, din_p, out_dims_p, w_itemsize, act_itemsize,
                      single_buffer_weights):
    """Rough resident-footprint estimate for the fused kernel."""
    wbuf = 1 if single_buffer_weights else 2
    total = 0
    prev = din_p
    for d in out_dims_p:
        total += wbuf * (prev * d * w_itemsize + d * 4)   # weights + bias
        prev = d
    total += 2 * tm * din_p * act_itemsize                # input tile (x2 buf)
    total += 2 * tm * out_dims_p[-1] * 4                  # output tile (x2 buf)
    widest = max([din_p] + list(out_dims_p))
    total += 2 * tm * widest * 4                          # live f32 intermediates
    return total


def _pick_tile(dim, prefer=(512, 256, 128)):
    for t in prefer:
        if dim % t == 0:
            return t
    return dim


# ----------------------------------------------------------------------------
# Forward factory
# ----------------------------------------------------------------------------
def make_mlp_forward(params, *, mxu_dtype=jnp.bfloat16, tm=512,
                     force_streamed=False):
    """Return a jitted MLP forward closing over pre-padded / pre-cast params."""
    padded, meta = prepare_mlp_params(params, mxu_dtype=mxu_dtype)
    num_layers = len(padded)
    din_p = meta["din_p"]
    dout = meta["dout"]
    out_dims_p = meta["out_dims_p"]
    act_dtype = meta["act_dtype"]
    dout_p = out_dims_p[-1]

    w_itemsize = jnp.dtype(act_dtype).itemsize
    act_itemsize = jnp.dtype(act_dtype).itemsize
    single_buf = _single_buffer_supported()
    vmem_limit = int(_physical_vmem_bytes() * 7 // 8)   # ~56 MiB v7x, ~112 v5e/v6e

    flat_wb = []
    for w_p, b_p in padded:
        flat_wb += [w_p, b_p]

    def _fused_call(x_p, wbs, tm_eff):
        n_p = x_p.shape[0]
        wb_specs = []
        prev_p = din_p
        for d_out_p in out_dims_p:
            wb_specs.append(_resident_spec((prev_p, d_out_p), single_buf))
            wb_specs.append(_resident_spec((1, d_out_p), single_buf))
            prev_p = d_out_p
        kernel = functools.partial(_mlp_fused_kernel, num_layers=num_layers,
                                   act_dtype=act_dtype)
        return pl.pallas_call(
            kernel,
            out_shape=jax.ShapeDtypeStruct((n_p, dout_p), jnp.float32),
            grid=(n_p // tm_eff,),
            in_specs=[pl.BlockSpec((tm_eff, din_p), lambda i: (i, 0))] + wb_specs,
            out_specs=pl.BlockSpec((tm_eff, dout_p), lambda i: (i, 0)),
            compiler_params=pltpu.CompilerParams(
                dimension_semantics=("parallel",),   # shard batch across TCs
                vmem_limit_bytes=vmem_limit,
            ),
        )(x_p, *wbs)

    def _streamed_layer(h, w_p, b_p, *, relu, out_dtype, tm_eff):
        m, k = h.shape
        _, n_out = w_p.shape
        tk = _pick_tile(k)
        tn = _pick_tile(n_out)
        kernel = functools.partial(_layer_kernel, relu=relu)
        return pl.pallas_call(
            kernel,
            out_shape=jax.ShapeDtypeStruct((m, n_out), out_dtype),
            grid=(m // tm_eff, n_out // tn, k // tk),
            in_specs=[
                pl.BlockSpec((tm_eff, tk), lambda i, j, kk: (i, kk)),
                pl.BlockSpec((tk, tn), lambda i, j, kk: (kk, j)),
                pl.BlockSpec((1, tn), lambda i, j, kk: (0, j)),
            ],
            out_specs=pl.BlockSpec((tm_eff, tn), lambda i, j, kk: (i, j)),
            scratch_shapes=[pltpu.VMEM((tm_eff, tn), jnp.float32)],
            compiler_params=pltpu.CompilerParams(
                dimension_semantics=("parallel", "parallel", "arbitrary"),
                vmem_limit_bytes=vmem_limit,
            ),
        )(h, w_p, b_p)

    @jax.jit
    def fwd(x, *wbs):
        n, d = x.shape
        # Batch tile: large by default (amortizes the ~0.35us/step overhead),
        # split into >=2 grid steps when the batch allows it (v7x megacore),
        # and shrink if the fused VMEM footprint exceeds the budget.
        tm_eff = _round_up(min(tm, _round_up(max(n, 8), 8)), 8)
        if n > 8 and _round_up(n, 8) <= tm_eff:
            tm_eff = max(8, _round_up((n + 1) // 2, 8))
        while tm_eff > 8 and _fused_vmem_bytes(
                tm_eff, din_p, out_dims_p, w_itemsize, act_itemsize,
                single_buf) > vmem_limit:
            tm_eff = max(8, _round_up(tm_eff // 2, 8))
        n_p = _round_up(n, tm_eff)

        # Only per-call pad: the activation (fuses under jit); cast once to the
        # MXU operand dtype so the kernel does no per-step casting of inputs.
        x_p = (jnp.zeros((n_p, din_p), act_dtype)
               .at[:n, :d].set(x.astype(act_dtype)))

        fits = _fused_vmem_bytes(tm_eff, din_p, out_dims_p, w_itemsize,
                                 act_itemsize, single_buf) <= vmem_limit
        if fits and not force_streamed:
            out_p = _fused_call(x_p, wbs, tm_eff)
        else:
            # Escape hatch (e.g. v7x's 64 MiB VMEM with big layers): stream
            # each layer's weights through a tiled matmul+bias(+ReLU) kernel,
            # carrying intermediates through HBM in the MXU operand dtype.
            h = x_p
            for i in range(num_layers):
                last = i == num_layers - 1
                h = _streamed_layer(
                    h, wbs[2 * i], wbs[2 * i + 1], relu=not last,
                    out_dtype=jnp.float32 if last else act_dtype,
                    tm_eff=tm_eff)
            out_p = h
        return out_p[:n, :dout].astype(x.dtype)

    return lambda x: fwd(x, *flat_wb)


# ----------------------------------------------------------------------------
# Init / reference (match nn.Linear semantics; weight stored as (in, out))
# ----------------------------------------------------------------------------
def init_mlp_params(key, input_dim, hidden_dim, output_dim, num_layers):
    h = [hidden_dim] * (num_layers - 1)
    dims_in = [input_dim] + h
    dims_out = h + [output_dim]
    params = []
    for n_in, n_out in zip(dims_in, dims_out):
        key, kw, kb = jax.random.split(key, 3)
        bound = 1.0 / jnp.sqrt(n_in)   # same scale as PyTorch default init
        w = jax.random.uniform(kw, (n_in, n_out), jnp.float32, -bound, bound)
        b = jax.random.uniform(kb, (n_out,), jnp.float32, -bound, bound)
        params.append((w, b))
    return params


def mlp_reference(x, params):
    h = x
    for i, (w, b) in enumerate(params):
        h = h @ w + b
        if i < len(params) - 1:
            h = jnp.maximum(h, 0.0)
    return h


if __name__ == "__main__":
    key = jax.random.PRNGKey(0)
    kx, kx2, kp = jax.random.split(key, 3)

    input_dim, hidden_dim, output_dim, num_layers = 16, 32, 8, 3
    batch = 8

    x = jax.random.normal(kx, (batch, input_dim), dtype=jnp.float32)
    params = init_mlp_params(kp, input_dim, hidden_dim, output_dim, num_layers)
    ref = mlp_reference(x, params)

    # 1) Exact f32 fused path.
    fwd_f32 = make_mlp_forward(params, mxu_dtype=None)
    out = fwd_f32(x)
    jax.block_until_ready(out)
    assert out.shape == (batch, output_dim)
    assert jnp.allclose(out, ref, atol=1e-5, rtol=1e-5)

    # 2) Default path: bf16 MXU operands, f32 accumulation (looser tolerance).
    fwd_bf16 = make_mlp_forward(params)
    out_bf16 = fwd_bf16(x)
    jax.block_until_ready(out_bf16)
    assert jnp.allclose(out_bf16, ref, atol=5e-2, rtol=5e-2)

    # 3) Non-multiple batch: exercises row padding + >=2-step batch grid.
    x2 = jax.random.normal(kx2, (50, input_dim), dtype=jnp.float32)
    out2 = fwd_f32(x2)
    jax.block_until_ready(out2)
    assert jnp.allclose(out2, mlp_reference(x2, params), atol=1e-5, rtol=1e-5)

    # 4) Streamed-weights fallback path (forced), exact in f32.
    fwd_stream = make_mlp_forward(params, mxu_dtype=None, force_streamed=True)
    out_s = fwd_stream(x)
    jax.block_until_ready(out_s)
    assert jnp.allclose(out_s, ref, atol=1e-5, rtol=1e-5)

    print("KERNEL_OK")
</pallas_src>

<mosaic_0001>
module attributes {stable_mosaic.version = 11 : i64} {
  func.func @_probe_kernel(%arg0: i32, %arg1: memref<8x128xf32, #tpu.memory_space<vmem>>, %arg2: memref<8x128xf32, #tpu.memory_space<vmem>>) attributes {dimension_semantics = [#tpu.dimension_semantics<arbitrary>], iteration_bounds = array<i64: 2>, scalar_prefetch = 0 : i64, scratch_operands = 0 : i64, tpu.core_type = #tpu.core_type<tc>, window_params = [{pipeline_mode = #tpu.pipeline_mode<synchronous>, transform_indices = @transform_0, window_bounds = array<i64: 8, 128>}, {pipeline_mode = #tpu.pipeline_mode<synchronous>, transform_indices = @transform_1, window_bounds = array<i64: 8, 128>}]} {
    %c0 = arith.constant 0 : index
    %c0_0 = arith.constant 0 : index
    %0 = vector.load %arg1[%c0, %c0_0] : memref<8x128xf32, #tpu.memory_space<vmem>>, vector<8x128xf32>
    %c0_1 = arith.constant 0 : index
    %c0_2 = arith.constant 0 : index
    %1 = vector.load %arg2[%c0_1, %c0_2] : memref<8x128xf32, #tpu.memory_space<vmem>>, vector<8x128xf32>
    tpu.vector_store %arg2[%c0_1, %c0_2], %0 {strides = array<i32>} : memref<8x128xf32, #tpu.memory_space<vmem>>, vector<8x128xf32>,
    return
  }
  func.func @transform_0(%arg0: i32) -> (i32, i32) {
    %c0_i32 = arith.constant 0 : i32
    %c0_i32_0 = arith.constant 0 : i32
    %c0_i32_1 = arith.constant 0 : i32
    return %c0_i32, %c0_i32_0 : i32, i32
  }
  func.func @transform_1(%arg0: i32) -> (i32, i32) {
    %c0_i32 = arith.constant 0 : i32
    %c0_i32_0 = arith.constant 0 : i32
    %c0_i32_1 = arith.constant 0 : i32
    return %c0_i32, %c0_i32_0 : i32, i32
  }
}

module attributes {stable_mosaic.version = 11 : i64} {
  func.func @_mlp_fused_kernel(%arg0: i32, %arg1: memref<8x128xf32, #tpu.memory_space<vmem>>, %arg2: memref<128x128xf32, #tpu.memory_space<vmem>>, %arg3: memref<1x128xf32, #tpu.memory_space<vmem>>, %arg4: memref<128x128xf32, #tpu.memory_space<vmem>>, %arg5: memref<1x128xf32, #tpu.memory_space<vmem>>, %arg6: memref<128x128xf32, #tpu.memory_space<vmem>>, %arg7: memref<1x128xf32, #tpu.memory_space<vmem>>, %arg8: memref<8x128xf32, #tpu.memory_space<vmem>>) attributes {dimension_semantics = [#tpu.dimension_semantics<parallel>], iteration_bounds = array<i64: 1>, scalar_prefetch = 0 : i64, scratch_operands = 0 : i64, tpu.core_type = #tpu.core_type<tc>, window_params = [{transform_indices = @transform_0, window_bounds = array<i64: 8, 128>}, {pipeline_mode = #tpu.pipeline_mode<synchronous>, transform_indices = @transform_1, window_bounds = array<i64: 128, 128>}, {pipeline_mode = #tpu.pipeline_mode<synchronous>, transform_indices = @transform_2, window_bounds = array<i64: 1, 128>}, {pipeline_mode = #tpu.pipeline_mode<synchronous>, transform_indices = @transform_3, window_bounds = array<i64: 128, 128>}, {pipeline_mode = #tpu.pipeline_mode<synchronous>, transform_indices = @transform_4, window_bounds = array<i64: 1, 128>}, {pipeline_mode = #tpu.pipeline_mode<synchronous>, transform_indices = @transform_5, window_bounds = array<i64: 128, 128>}, {pipeline_mode = #tpu.pipeline_mode<synchronous>, transform_indices = @transform_6, window_bounds = array<i64: 1, 128>}, {transform_indices = @transform_7, window_bounds = array<i64: 8, 128>}]} {
    %c0 = arith.constant 0 : index
    %c0_0 = arith.constant 0 : index
    %0 = vector.load %arg1[%c0, %c0_0] : memref<8x128xf32, #tpu.memory_space<vmem>>, vector<8x128xf32>
    %c0_1 = arith.constant 0 : index
    %c0_2 = arith.constant 0 : index
    %1 = vector.load %arg2[%c0_1, %c0_2] : memref<128x128xf32, #tpu.memory_space<vmem>>, vector<128x128xf32>
    %c0_3 = arith.constant 0 : index
    %c0_4 = arith.constant 0 : index
    %2 = vector.load %arg3[%c0_3, %c0_4] : memref<1x128xf32, #tpu.memory_space<vmem>>, vector<1x128xf32>
    %cst = arith.constant dense<0.000000e+00> : vector<8x128xf32>
    %3 = tpu.matmul %0, %1, %cst {dimension_numbers = #tpu.dot_dimension_numbers<[1], [0], [0], [1], [0, 0, 1, 1], [], []>} : vector<8x128xf32>, vector<128x128xf32>, vector<8x128xf32> -> vector<8x128xf32>
    %4 = vector.broadcast %2 : vector<1x128xf32> to vector<8x128xf32>
    %5 = arith.addf %3, %4 : vector<8x128xf32>
    %cst_5 = arith.constant 0.000000e+00 : f32
    %6 = vector.broadcast %cst_5 : f32 to vector<8x128xf32>
    %7 = arith.maximumf %5, %6 : vector<8x128xf32>
    %c0_6 = arith.constant 0 : index
    %c0_7 = arith.constant 0 : index
    %8 = vector.load %arg4[%c0_6, %c0_7] : memref<128x128xf32, #tpu.memory_space<vmem>>, vector<128x128xf32>
    %c0_8 = arith.constant 0 : index
    %c0_9 = arith.constant 0 : index
    %9 = vector.load %arg5[%c0_8, %c0_9] : memref<1x128xf32, #tpu.memory_space<vmem>>, vector<1x128xf32>
    %cst_10 = arith.constant dense<0.000000e+00> : vector<8x128xf32>
    %10 = tpu.matmul %7, %8, %cst_10 {dimension_numbers = #tpu.dot_dimension_numbers<[1], [0], [0], [1], [0, 0, 1, 1], [], []>} : vector<8x128xf32>, vector<128x128xf32>, vector<8x128xf32> -> vector<8x128xf32>
    %11 = vector.broadcast %9 : vector<1x128xf32> to vector<8x128xf32>
    %12 = arith.addf %10, %11 : vector<8x128xf32>
    %cst_11 = arith.constant 0.000000e+00 : f32
    %13 = vector.broadcast %cst_11 : f32 to vector<8x128xf32>
    %14 = arith.maximumf %12, %13 : vector<8x128xf32>
    %c0_12 = arith.constant 0 : index
    %c0_13 = arith.constant 0 : index
    %15 = vector.load %arg6[%c0_12, %c0_13] : memref<128x128xf32, #tpu.memory_space<vmem>>, vector<128x128xf32>
    %c0_14 = arith.constant 0 : index
    %c0_15 = arith.constant 0 : index
    %16 = vector.load %arg7[%c0_14, %c0_15] : memref<1x128xf32, #tpu.memory_space<vmem>>, vector<1x128xf32>
    %cst_16 = arith.constant dense<0.000000e+00> : vector<8x128xf32>
    %17 = tpu.matmul %14, %15, %cst_16 {dimension_numbers = #tpu.dot_dimension_numbers<[1], [0], [0], [1], [0, 0, 1, 1], [], []>} : vector<8x128xf32>, vector<128x128xf32>, vector<8x128xf32> -> vector<8x128xf32>
    %18 = vector.broadcast %16 : vector<1x128xf32> to vector<8x128xf32>
    %19 = arith.addf %17, %18 : vector<8x128xf32>
    %c0_17 = arith.constant 0 : index
    %c0_18 = arith.constant 0 : index
    %20 = vector.load %arg8[%c0_17, %c0_18] : memref<8x128xf32, #tpu.memory_space<vmem>>, vector<8x128xf32>
    tpu.vector_store %arg8[%c0_17, %c0_18], %19 {strides = array<i32>} : memref<8x128xf32, #tpu.memory_space<vmem>>, vector<8x128xf32>,
    return
  }
  func.func @transform_0(%arg0: i32) -> (i32, i32) {
    %c0_i32 = arith.constant 0 : i32
    %c0_i32_0 = arith.constant 0 : i32
    return %arg0, %c0_i32 : i32, i32
  }
  func.func @transform_1(%arg0: i32) -> (i32, i32) {
    %c0_i32 = arith.constant 0 : i32
    %c0_i32_0 = arith.constant 0 : i32
    %c0_i32_1 = arith.constant 0 : i32
    return %c0_i32, %c0_i32_0 : i32, i32
  }
  func.func @transform_2(%arg0: i32) -> (i32, i32) {
    %c0_i32 = arith.constant 0 : i32
    %c0_i32_0 = arith.constant 0 : i32
    %c0_i32_1 = arith.constant 0 : i32
    return %c0_i32, %c0_i32_0 : i32, i32
  }
  func.func @transform_3(%arg0: i32) -> (i32, i32) {
    %c0_i32 = arith.constant 0 : i32
    %c0_i32_0 = arith.constant 0 : i32
    %c0_i32_1 = arith.constant 0 : i32
    return %c0_i32, %c0_i32_0 : i32, i32
  }
  func.func @transform_4(%arg0: i32) -> (i32, i32) {
    %c0_i32 = arith.constant 0 : i32
    %c0_i32_0 = arith.constant 0 : i32
    %c0_i32_1 = arith.constant 0 : i32
    return %c0_i32, %c0_i32_0 : i32, i32
  }
  func.func @transform_5(%arg0: i32) -> (i32, i32) {
    %c0_i32 = arith.constant 0 : i32
    %c0_i32_0 = arith.constant 0 : i32
    %c0_i32_1 = arith.constant 0 : i32
    return %c0_i32, %c0_i32_0 : i32, i32
  }
  func.func @transform_6(%arg0: i32) -> (i32, i32) {
    %c0_i32 = arith.constant 0 : i32
    %c0_i32_0 = arith.constant 0 : i32
    %c0_i32_1 = arith.constant 0 : i32
    return %c0_i32, %c0_i32_0 : i32, i32
  }
  func.func @transform_7(%arg0: i32) -> (i32, i32) {
    %c0_i32 = arith.constant 0 : i32
    %c0_i32_0 = arith.constant 0 : i32
    return %arg0, %c0_i32 : i32, i32
  }
}

</mosaic_0001>

<llo_original>
// kernel: tpu_custom_call.1
$region0: #{tpu_custom_call.1}
  #allocation0 [shape = 'u32[]', space=smem, size = 0x4, offset = 0x4, fixed_abs, tag = 'smem constant byte address 0x4 - core index']
  #allocation1 [shape = 'u32[144,128]{1,0:T(1,128)}', space=vmem, size = 0x12000, scoped, tag = 'internal scratch']
  %s0 = inlined_call_operand.hbm [shape: f32[8,128], index: 0, kind: input, shape index: {}]
  %s1 = inlined_call_operand.hbm [shape: f32[8,128], index: 1, kind: output, shape index: {}]
  %s2 = sld [smem:[#allocation0]]
  $region41: #{tpu_custom_call.1} parent=0
    _
  %s4 = ssub.s32 1, %s2
  %s5 = scalar_select 0, %s4, %s2
  $region1: #{tpu_custom_call.1} parent=0
    #allocation2 [shape = 'u8[4096]{0}', space=vmem, size = 0x1000, scoped, tag = 'input window, operand 0, single buffered']
    #allocation3 [shape = 's32[2]{0}', space=sflag, size = 0x8, scoped, tag = 'scoped memory for tpu_custom_call.1']
    #allocation4 [shape = 's32[2]{0}', space=sflag, size = 0x8, scoped, tag = 'scoped memory for tpu_custom_call.1']
    #allocation5 [shape = 'u8[4096]{0}', space=vmem, size = 0x1000, scoped, tag = 'output window, operand 0, single buffered']
    %6 = vsyncpa [#allocation3], 0
    %7 = vsyncpa [#allocation4], 0
    loop: start=0, step=1, limit=4
    $region2: #{tpu_custom_call.1} parent=1 // loop_pre_header
      _
    $region3: #{tpu_custom_call.1} parent=1 // loop_header
      %s9 = sphi 0, %s13
      %p10 = scmp.ge.s32.totalorder %s9, 4
      %s17 = sphi 0, %s17
      %s19 = sphi 0, %s17
      %s20 = sphi 0, %s19
      %s34 = sphi 0, %s20
      %s38 = sphi 0, %s38
      %s40 = sphi 0, %s38
      %s41 = sphi 0, %s40
      %s55 = sphi 0, %s41
    $region4: #{tpu_custom_call.1} parent=1 // loop_header_branch
      %12 = sbr.rel (%p10) target = $region8
    $region5: #{tpu_custom_call.1} parent=1 // loop_body
      %s14 = ssub.s32 %s9, 1
      %s15 = ssub.s32 %s9, 2
      %s16 = sadd.s32 %s9, 1
      %s18 = sadd.s32 %s17, 1
      %p21 = scmp.eq.s32.totalorder %s9, 1
      %p22 = scmp.ne.s32.totalorder %s17, %s19
      %p23 = scmp.eq.s32.totalorder %s9, 0
      %p24 = por %p22, %p23
      %p25 = scmp.ne.s32.totalorder %s17, %s19
      %p26 = scmp.eq.s32.totalorder %s14, 1
      %p27 = por %p25, %p26
      %p28 = scmp.ne.s32.totalorder %s19, %s20
      %p29 = scmp.eq.s32.totalorder %s14, 0
      %p30 = por %p28, %p29
      %p31 = scmp.ne.s32.totalorder %s19, %s20
      %p32 = scmp.eq.s32.totalorder %s15, 1
      %p33 = por %p31, %p32
      %p35 = scmp.ne.s32.totalorder %s20, %s34
      %p36 = scmp.eq.s32.totalorder %s15, 0
      %p37 = por %p35, %p36
      %s39 = sadd.s32 %s38, 1
      %p42 = scmp.eq.s32.totalorder %s9, 1
      %p43 = scmp.ne.s32.totalorder %s38, %s40
      %p44 = scmp.eq.s32.totalorder %s9, 0
      %p45 = por %p43, %p44
      %p46 = scmp.ne.s32.totalorder %s38, %s40
      %p47 = scmp.eq.s32.totalorder %s14, 1
      %p48 = por %p46, %p47
      %p49 = scmp.ne.s32.totalorder %s40, %s41
      %p50 = scmp.eq.s32.totalorder %s14, 0
      %p51 = por %p49, %p50
      %p52 = scmp.ne.s32.totalorder %s40, %s41
      %p53 = scmp.eq.s32.totalorder %s15, 1
      %p54 = por %p52, %p53
      %p56 = scmp.ne.s32.totalorder %s41, %s55
      %p57 = scmp.eq.s32.totalorder %s15, 0
      %p58 = por %p56, %p57
      %p59 = scmp.le.s32.totalorder 1, %s9
      %p60 = scmp.lt.s32.totalorder %s9, 3
      %p61 = pnand %p59, %p60
      %p62 = pneg %p61
      // Predicated region
      $region9: #{tpu_custom_call.1} parent=5 // pred_check
        _
      $region10: #{tpu_custom_call.1} parent=5 // pred_check_branch
        %64 = sbr.rel (%p61) target = $region12
      $region11: #{tpu_custom_call.1} parent=5 // pred_region
        %s65 = ssub.s32 %s9, 1
        // Predicated region
        $region13: #{tpu_custom_call.1} parent=11 // pred_check
          %p66 = pneg %p30
        $region14: #{tpu_custom_call.1} parent=11 // pred_check_branch
          %68 = sbr.rel (%p66) target = $region16
        $region15: #{tpu_custom_call.1} parent=11 // pred_region
          %s70 = ssub.s32 128, 128
          %71 = vsyncadd [#allocation3], %s70
          %s73 = sshll.u32 [#allocation2], 4
          %s74 = int_to_ptr.vmem [resolvable:$true] %s73
          %76 = dma.hbm_to_vmem [thread:$0]  %s0, 128, %s74, [#allocation3]
        $region16: #{tpu_custom_call.1} parent=11 // pred_fallthru
          _
      $region12: #{tpu_custom_call.1} parent=5 // pred_fallthru
        _
      %p77 = scmp.lt.s32.totalorder %s9, 2
      // Predicated region
      $region17: #{tpu_custom_call.1} parent=5 // pred_check
        %p78 = pneg %p77
      $region18: #{tpu_custom_call.1} parent=5 // pred_check_branch
        %80 = sbr.rel (%p78) target = $region20
      $region19: #{tpu_custom_call.1} parent=5 // pred_region
        _
      $region20: #{tpu_custom_call.1} parent=5 // pred_fallthru
        _
      %p81 = scmp.le.s32.totalorder 1, %s9
      %p82 = scmp.lt.s32.totalorder %s9, 3
      %p83 = pnand %p81, %p82
      %p84 = pneg %p83
      // Predicated region
      $region21: #{tpu_custom_call.1} parent=5 // pred_check
        _
      $region22: #{tpu_custom_call.1} parent=5 // pred_check_branch
        %86 = sbr.rel (%p83) target = $region24
      $region23: #{tpu_custom_call.1} parent=5 // pred_region
        %s87 = ssub.s32 %s9, 1
        // Predicated region
        $region25: #{tpu_custom_call.1} parent=23 // pred_check
          %p88 = pneg %p30
        $region26: #{tpu_custom_call.1} parent=23 // pred_check_branch
          %90 = sbr.rel (%p88) target = $region28
        $region27: #{tpu_custom_call.1} parent=23 // pred_region
          %91 = dma.done [#allocation3], 128
        $region28: #{tpu_custom_call.1} parent=23 // pred_fallthru
          _
        %p92 = pneg %p30
        %p93 = pneg %p27
        %p94 = pneg %p51
        %p95 = pneg %p48
        %v96 = vld [vmem:[#allocation2] sm:$0xff]
        %97 = vst [vmem:[#allocation5] sm:$0xff] %v96
        // Predicated region
        $region29: #{tpu_custom_call.1} parent=23 // pred_check
          %p98 = pneg %p48
        $region30: #{tpu_custom_call.1} parent=23 // pred_check_branch
          %100 = sbr.rel (%p98) target = $region32
        $region31: #{tpu_custom_call.1} parent=23 // pred_region
          %s102 = ssub.s32 128, 128
          %103 = vsyncadd [#allocation4], %s102
          %s105 = sshll.u32 [#allocation5], 4
          %s106 = int_to_ptr.vmem [resolvable:$true] %s105
          %108 = dma.vmem_to_hbm [thread:$0]  %s106, 128, %s1, [#allocation4]
        $region32: #{tpu_custom_call.1} parent=23 // pred_fallthru
          _
        // Predicated region
        $region33: #{tpu_custom_call.1} parent=23 // pred_check
          %p109 = pneg %p48
        $region34: #{tpu_custom_call.1} parent=23 // pred_check_branch
          %111 = sbr.rel (%p109) target = $region36
        $region35: #{tpu_custom_call.1} parent=23 // pred_region
          %112 = dma.done [#allocation4], 128
        $region36: #{tpu_custom_call.1} parent=23 // pred_fallthru
          _
      $region24: #{tpu_custom_call.1} parent=5 // pred_fallthru
        _
      %p113 = scmp.le.s32.totalorder 2, %s9
      // Predicated region
      $region37: #{tpu_custom_call.1} parent=5 // pred_check
        %p114 = pneg %p113
      $region38: #{tpu_custom_call.1} parent=5 // pred_check_branch
        %116 = sbr.rel (%p114) target = $region40
      $region39: #{tpu_custom_call.1} parent=5 // pred_region
        %s117 = ssub.s32 %s9, 2
      $region40: #{tpu_custom_call.1} parent=5 // pred_fallthru
        _
    $region6: #{tpu_custom_call.1} parent=1 // loop_footer
      %s13 = sadd.s32 1, %s9
    $region7: #{tpu_custom_call.1} parent=1 // loop_footer_branch
      %8 = sbr.rel target = $region3
    $region8: #{tpu_custom_call.1} parent=1 // loop_exit
      _
    %118 = vsyncpa [#allocation3], 1
    %s119 = scalar_lea.sflag [#allocation3], 1
    %120 = vsyncpa %s119, 1
    %121 = vsyncpa [#allocation4], 1
    %s122 = scalar_lea.sflag [#allocation4], 1
    %123 = vsyncpa %s122, 1

// kernel: fwd.1
$region0: #{fwd.1}
  #allocation0 [shape = 'u32[]', space=smem, size = 0x4, offset = 0x4, fixed_abs, tag = 'smem constant byte address 0x4 - core index']
  #allocation1 [shape = 'u32[144,128]{1,0:T(1,128)}', space=vmem, size = 0x12000, scoped, tag = 'internal scratch']
  %s0 = inlined_call_operand.vmem [shape: f32[8,128], index: 0, kind: input, shape index: {}]
  %s1 = inlined_call_operand.hbm [shape: f32[128,128], index: 1, kind: input, shape index: {}]
  %s2 = inlined_call_operand.vmem [shape: f32[1,128], index: 2, kind: input, shape index: {}]
  %s3 = inlined_call_operand.hbm [shape: f32[128,128], index: 3, kind: input, shape index: {}]
  %s4 = inlined_call_operand.vmem [shape: f32[1,128], index: 4, kind: input, shape index: {}]
  %s5 = inlined_call_operand.hbm [shape: f32[128,128], index: 5, kind: input, shape index: {}]
  %s6 = inlined_call_operand.vmem [shape: f32[1,128], index: 6, kind: input, shape index: {}]
  %s7 = inlined_call_operand.hbm [shape: f32[8,128], index: 7, kind: output, shape index: {}]
  %s8 = sld [smem:[#allocation0]]
  $region50: #{fwd.1} parent=0
    _
  %s10 = ssub.s32 1, %s8
  %s11 = scalar_select 0, %s10, %s8
  $region1: #{fwd.1} parent=0
    #allocation2 [shape = 'u8[65536]{0}', space=vmem, size = 0x10000, scoped, tag = 'input window, operand 1, single buffered']
    #allocation3 [shape = 's32[1]{0}', space=sflag, size = 0x4, scoped, tag = 'scoped memory for fwd.1']
    #allocation4 [shape = 's32[1]{0}', space=sflag, size = 0x4, scoped, tag = 'scoped memory for fwd.1']
    #allocation5 [shape = 'u8[65536]{0}', space=vmem, size = 0x10000, scoped, tag = 'input window, operand 3, single buffered']
    #allocation6 [shape = 's32[1]{0}', space=sflag, size = 0x4, scoped, tag = 'scoped memory for fwd.1']
    #allocation7 [shape = 'u8[65536]{0}', space=vmem, size = 0x10000, scoped, tag = 'input window, operand 5, single buffered']
    #allocation8 [shape = 'u8[4096]{0}', space=vmem, size = 0x1000, scoped, tag = 'output window, operand 0, single buffered']
    %12 = vsyncpa [#allocation3], 0
    %13 = vsyncpa [#allocation6], 0
    %14 = vsyncpa [#allocation4], 0
    // Predicated region
    $region2: #{fwd.1} parent=1 // pred_check
      _
    $region3: #{fwd.1} parent=1 // pred_check_branch
      %16 = sbr.rel (0) target = $region5
    $region4: #{fwd.1} parent=1 // pred_region
      _
    $region5: #{fwd.1} parent=1 // pred_fallthru
      _
    // Predicated region
    $region6: #{fwd.1} parent=1 // pred_check
      _
    $region7: #{fwd.1} parent=1 // pred_check_branch
      %18 = sbr.rel (0) target = $region9
    $region8: #{fwd.1} parent=1 // pred_region
      %s20 = ssub.s32 2048, 2048
      %21 = vsyncadd [#allocation3], %s20
      %s22 = sshll.u32 [#allocation2], 4
      %s23 = int_to_ptr.vmem [resolvable:$true] %s22
      %28 = dma.hbm_to_vmem [thread:$0]  %s1, 2048, %s23, [#allocation3], 128, 128, 8
    $region9: #{fwd.1} parent=1 // pred_fallthru
      _
    // Predicated region
    $region10: #{fwd.1} parent=1 // pred_check
      _
    $region11: #{fwd.1} parent=1 // pred_check_branch
      %30 = sbr.rel (0) target = $region13
    $region12: #{fwd.1} parent=1 // pred_region
      _
    $region13: #{fwd.1} parent=1 // pred_fallthru
      _
    // Predicated region
    $region14: #{fwd.1} parent=1 // pred_check
      _
    $region15: #{fwd.1} parent=1 // pred_check_branch
      %32 = sbr.rel (0) target = $region17
    $region16: #{fwd.1} parent=1 // pred_region
      %s34 = ssub.s32 2048, 2048
      %35 = vsyncadd [#allocation6], %s34
      %s36 = sshll.u32 [#allocation5], 4
      %s37 = int_to_ptr.vmem [resolvable:$true] %s36
      %42 = dma.hbm_to_vmem [thread:$0]  %s3, 2048, %s37, [#allocation6], 128, 128, 8
    $region17: #{fwd.1} parent=1 // pred_fallthru
      _
    // Predicated region
    $region18: #{fwd.1} parent=1 // pred_check
      _
    $region19: #{fwd.1} parent=1 // pred_check_branch
      %44 = sbr.rel (0) target = $region21
    $region20: #{fwd.1} parent=1 // pred_region
      _
    $region21: #{fwd.1} parent=1 // pred_fallthru
      _
    // Predicated region
    $region22: #{fwd.1} parent=1 // pred_check
      _
    $region23: #{fwd.1} parent=1 // pred_check_branch
      %46 = sbr.rel (0) target = $region25
    $region24: #{fwd.1} parent=1 // pred_region
      %s48 = ssub.s32 2048, 2048
      %49 = vsyncadd [#allocation6], %s48
      %s50 = sshll.u32 [#allocation7], 4
      %s51 = int_to_ptr.vmem [resolvable:$true] %s50
      %56 = dma.hbm_to_vmem [thread:$0]  %s5, 2048, %s51, [#allocation6], 128, 128, 8
    $region25: #{fwd.1} parent=1 // pred_fallthru
      _
    // Predicated region
    $region26: #{fwd.1} parent=1 // pred_check
      _
    $region27: #{fwd.1} parent=1 // pred_check_branch
      %58 = sbr.rel (0) target = $region29
    $region28: #{fwd.1} parent=1 // pred_region
      _
    $region29: #{fwd.1} parent=1 // pred_fallthru
      _
    // Predicated region
    $region30: #{fwd.1} parent=1 // pred_check
      _
    $region31: #{fwd.1} parent=1 // pred_check_branch
      %60 = sbr.rel (0) target = $region33
    $region32: #{fwd.1} parent=1 // pred_region
      %61 = dma.done [#allocation3], 2048
    $region33: #{fwd.1} parent=1 // pred_fallthru
      _
    // Predicated region
    $region34: #{fwd.1} parent=1 // pred_check
      _
    $region35: #{fwd.1} parent=1 // pred_check_branch
      %63 = sbr.rel (0) target = $region37
    $region36: #{fwd.1} parent=1 // pred_region
      %64 = dma.done [#allocation6], 2048
    $region37: #{fwd.1} parent=1 // pred_fallthru
      _
    // Predicated region
    $region38: #{fwd.1} parent=1 // pred_check
      _
    $region39: #{fwd.1} parent=1 // pred_check_branch
      %66 = sbr.rel (0) target = $region41
    $region40: #{fwd.1} parent=1 // pred_region
      %67 = dma.done [#allocation6], 2048
    $region41: #{fwd.1} parent=1 // pred_fallthru
      _
    %v68 = vld [vmem:[%s0] sm:$0xff]
    %v69 = vld [vmem:[#allocation2] sm:$0xff]
    %v70 = vld [vmem:[#allocation2 + $0x8] sm:$0xff]
    %v71 = vld [vmem:[#allocation2 + $0x10] sm:$0xff]
    %v72 = vld [vmem:[#allocation2 + $0x18] sm:$0xff]
    %v73 = vld [vmem:[#allocation2 + $0x20] sm:$0xff]
    %v74 = vld [vmem:[#allocation2 + $0x28] sm:$0xff]
    %v75 = vld [vmem:[#allocation2 + $0x30] sm:$0xff]
    %v76 = vld [vmem:[#allocation2 + $0x38] sm:$0xff]
    %v77 = vld [vmem:[#allocation2 + $0x40] sm:$0xff]
    %v78 = vld [vmem:[#allocation2 + $0x48] sm:$0xff]
    %v79 = vld [vmem:[#allocation2 + $0x50] sm:$0xff]
    %v80 = vld [vmem:[#allocation2 + $0x58] sm:$0xff]
    %v81 = vld [vmem:[#allocation2 + $0x60] sm:$0xff]
    %v82 = vld [vmem:[#allocation2 + $0x68] sm:$0xff]
    %v83 = vld [vmem:[#allocation2 + $0x70] sm:$0xff]
    %v84 = vld [vmem:[#allocation2 + $0x78] sm:$0xff]
    %v85 = vld [vmem:[%s2] sm:$0x1]
    %v87 = vlaneseq
    %v88 = vshrl.u32 %v87, 7
    %v89 = vsub.s32 0, %v88
    %v90 = vrot.slane %v85, %v89
    %92 = vmatprep.subr.mxu0 0.0
    %93 = vmatpush1.msra.mxu0 %v69
    %94 = vmatprep.subr.mxu0 0.0
    %95 = vmatpush1.msra.mxu0 %v70
    %96 = vmatprep.subr.mxu0 0.0
    %97 = vmatpush1.msra.mxu0 %v71
    %98 = vmatprep.subr.mxu0 0.0
    %99 = vmatpush1.msra.mxu0 %v72
    %100 = vmatprep.subr.mxu0 0.0
    %101 = vmatpush1.msra.mxu0 %v73
    %102 = vmatprep.subr.mxu0 0.0
    %103 = vmatpush1.msra.mxu0 %v74
    %104 = vmatprep.subr.mxu0 0.0
    %105 = vmatpush1.msra.mxu0 %v75
    %106 = vmatprep.subr.mxu0 0.0
    %107 = vmatpush1.msra.mxu0 %v76
    %108 = vmatprep.subr.mxu0 0.0
    %109 = vmatpush1.msra.mxu0 %v77
    %110 = vmatprep.subr.mxu0 0.0
    %111 = vmatpush1.msra.mxu0 %v78
    %112 = vmatprep.subr.mxu0 0.0
    %113 = vmatpush1.msra.mxu0 %v79
    %114 = vmatprep.subr.mxu0 0.0
    %115 = vmatpush1.msra.mxu0 %v80
    %116 = vmatprep.subr.mxu0 0.0
    %117 = vmatpush1.msra.mxu0 %v81
    %118 = vmatprep.subr.mxu0 0.0
    %119 = vmatpush1.msra.mxu0 %v82
    %120 = vmatprep.subr.mxu0 0.0
    %121 = vmatpush1.msra.mxu0 %v83
    %122 = vmatprep.subr.mxu0 0.0
    %123 = vmatpush1.msra.mxu0 %v84
    %124 = vmatprep.subr.mxu0 0.0
    %125 = vmatpush1.msra.mxu0 0.0
    %126 = vmatprep.subr.mxu0 0.0
    %127 = vmatpush1.msra.mxu0 0.0
    %128 = vmatprep.subr.mxu0 0.0
    %129 = vmatpush1.msra.mxu0 0.0
    %130 = vmatprep.subr.mxu0 0.0
    %131 = vmatpush1.msra.mxu0 0.0
    %132 = vmatprep.subr.mxu0 0.0
    %133 = vmatpush1.msra.mxu0 0.0
    %134 = vmatprep.subr.mxu0 0.0
    %135 = vmatpush1.msra.mxu0 0.0
    %136 = vmatprep.subr.mxu0 0.0
    %137 = vmatpush1.msra.mxu0 0.0
    %138 = vmatprep.subr.mxu0 0.0
    %139 = vmatpush1.msra.mxu0 0.0
    %140 = vmatprep.subr.mxu0 0.0
    %141 = vmatpush1.msra.mxu0 0.0
    %142 = vmatprep.subr.mxu0 0.0
    %143 = vmatpush1.msra.mxu0 0.0
    %144 = vmatprep.subr.mxu0 0.0
    %145 = vmatpush1.msra.mxu0 0.0
    %146 = vmatprep.subr.mxu0 0.0
    %147 = vmatpush1.msra.mxu0 0.0
    %148 = vmatprep.subr.mxu0 0.0
    %149 = vmatpush1.msra.mxu0 0.0
    %150 = vmatprep.subr.mxu0 0.0
    %151 = vmatpush1.msra.mxu0 0.0
    %152 = vmatprep.subr.mxu0 0.0
    %153 = vmatpush1.msra.mxu0 0.0
    %154 = vmatprep.subr.mxu0 0.0
    %155 = vmatpush1.msra.mxu0 0.0
    %156 = vmatprep.mubr.f32.mxu0 0.0
    %157 = vmatmul.mubr.f32.gmra.mrb[0].mxu0 %v68
    %v158 = vpop.f32.mrb[0].mxu0
    %v159 = vadd.f32 %v90, %v158
    %v160 = vpop.f32.mrb[0].mxu0
    %161 = vdwg.mxu0
    %v162 = vmax.f32 %v159, 0.0
    %v163 = vld [vmem:[#allocation5] sm:$0xff]
    %v164 = vld [vmem:[#allocation5 + $0x8] sm:$0xff]
    %v165 = vld [vmem:[#allocation5 + $0x10] sm:$0xff]
    %v166 = vld [vmem:[#allocation5 + $0x18] sm:$0xff]
    %v167 = vld [vmem:[#allocation5 + $0x20] sm:$0xff]
    %v168 = vld [vmem:[#allocation5 + $0x28] sm:$0xff]
    %v169 = vld [vmem:[#allocation5 + $0x30] sm:$0xff]
    %v170 = vld [vmem:[#allocation5 + $0x38] sm:$0xff]
    %v171 = vld [vmem:[#allocation5 + $0x40] sm:$0xff]
    %v172 = vld [vmem:[#allocation5 + $0x48] sm:$0xff]
    %v173 = vld [vmem:[#allocation5 + $0x50] sm:$0xff]
    %v174 = vld [vmem:[#allocation5 + $0x58] sm:$0xff]
    %v175 = vld [vmem:[#allocation5 + $0x60] sm:$0xff]
    %v176 = vld [vmem:[#allocation5 + $0x68] sm:$0xff]
    %v177 = vld [vmem:[#allocation5 + $0x70] sm:$0xff]
    %v178 = vld [vmem:[#allocation5 + $0x78] sm:$0xff]
    %v179 = vld [vmem:[%s4] sm:$0x1]
    %v181 = vlaneseq
    %v182 = vshrl.u32 %v181, 7
    %v183 = vsub.s32 0, %v182
    %v184 = vrot.slane %v179, %v183
    %186 = vmatprep.subr.mxu0 0.0
    %187 = vmatpush1.msra.mxu0 %v163
    %188 = vmatprep.subr.mxu0 0.0
    %189 = vmatpush1.msra.mxu0 %v164
    %190 = vmatprep.subr.mxu0 0.0
    %191 = vmatpush1.msra.mxu0 %v165
    %192 = vmatprep.subr.mxu0 0.0
    %193 = vmatpush1.msra.mxu0 %v166
    %194 = vmatprep.subr.mxu0 0.0
    %195 = vmatpush1.msra.mxu0 %v167
    %196 = vmatprep.subr.mxu0 0.0
    %197 = vmatpush1.msra.mxu0 %v168
    %198 = vmatprep.subr.mxu0 0.0
    %199 = vmatpush1.msra.mxu0 %v169
    %200 = vmatprep.subr.mxu0 0.0
    %201 = vmatpush1.msra.mxu0 %v170
    %202 = vmatprep.subr.mxu0 0.0
    %203 = vmatpush1.msra.mxu0 %v171
    %204 = vmatprep.subr.mxu0 0.0
    %205 = vmatpush1.msra.mxu0 %v172
    %206 = vmatprep.subr.mxu0 0.0
    %207 = vmatpush1.msra.mxu0 %v173
    %208 = vmatprep.subr.mxu0 0.0
    %209 = vmatpush1.msra.mxu0 %v174
    %210 = vmatprep.subr.mxu0 0.0
    %211 = vmatpush1.msra.mxu0 %v175
    %212 = vmatprep.subr.mxu0 0.0
    %213 = vmatpush1.msra.mxu0 %v176
    %214 = vmatprep.subr.mxu0 0.0
    %215 = vmatpush1.msra.mxu0 %v177
    %216 = vmatprep.subr.mxu0 0.0
    %217 = vmatpush1.msra.mxu0 %v178
    %218 = vmatprep.subr.mxu0 0.0
    %219 = vmatpush1.msra.mxu0 0.0
    %220 = vmatprep.subr.mxu0 0.0
    %221 = vmatpush1.msra.mxu0 0.0
    %222 = vmatprep.subr.mxu0 0.0
    %223 = vmatpush1.msra.mxu0 0.0
    %224 = vmatprep.subr.mxu0 0.0
    %225 = vmatpush1.msra.mxu0 0.0
    %226 = vmatprep.subr.mxu0 0.0
    %227 = vmatpush1.msra.mxu0 0.0
    %228 = vmatprep.subr.mxu0 0.0
    %229 = vmatpush1.msra.mxu0 0.0
    %230 = vmatprep.subr.mxu0 0.0
    %231 = vmatpush1.msra.mxu0 0.0
    %232 = vmatprep.subr.mxu0 0.0
    %233 = vmatpush1.msra.mxu0 0.0
    %234 = vmatprep.subr.mxu0 0.0
    %235 = vmatpush1.msra.mxu0 0.0
    %236 = vmatprep.subr.mxu0 0.0
    %237 = vmatpush1.msra.mxu0 0.0
    %238 = vmatprep.subr.mxu0 0.0
    %239 = vmatpush1.msra.mxu0 0.0
    %240 = vmatprep.subr.mxu0 0.0
    %241 = vmatpush1.msra.mxu0 0.0
    %242 = vmatprep.subr.mxu0 0.0
    %243 = vmatpush1.msra.mxu0 0.0
    %244 = vmatprep.subr.mxu0 0.0
    %245 = vmatpush1.msra.mxu0 0.0
    %246 = vmatprep.subr.mxu0 0.0
    %247 = vmatpush1.msra.mxu0 0.0
    %248 = vmatprep.subr.mxu0 0.0
    %249 = vmatpush1.msra.mxu0 0.0
    %250 = vmatprep.mubr.f32.mxu0 0.0
    %251 = vmatmul.mubr.f32.gmra.mrb[0].mxu0 %v162
    %v252 = vpop.f32.mrb[0].mxu0
    %v253 = vadd.f32 %v184, %v252
    %v254 = vpop.f32.mrb[0].mxu0
    %255 = vdwg.mxu0
    %v256 = vmax.f32 %v253, 0.0
    %v257 = vld [vmem:[#allocation7] sm:$0xff]
    %v258 = vld [vmem:[#allocation7 + $0x8] sm:$0xff]
    %v259 = vld [vmem:[#allocation7 + $0x10] sm:$0xff]
    %v260 = vld [vmem:[#allocation7 + $0x18] sm:$0xff]
    %v261 = vld [vmem:[#allocation7 + $0x20] sm:$0xff]
    %v262 = vld [vmem:[#allocation7 + $0x28] sm:$0xff]
    %v263 = vld [vmem:[#allocation7 + $0x30] sm:$0xff]
    %v264 = vld [vmem:[#allocation7 + $0x38] sm:$0xff]
    %v265 = vld [vmem:[#allocation7 + $0x40] sm:$0xff]
    %v266 = vld [vmem:[#allocation7 + $0x48] sm:$0xff]
    %v267 = vld [vmem:[#allocation7 + $0x50] sm:$0xff]
    %v268 = vld [vmem:[#allocation7 + $0x58] sm:$0xff]
    %v269 = vld [vmem:[#allocation7 + $0x60] sm:$0xff]
    %v270 = vld [vmem:[#allocation7 + $0x68] sm:$0xff]
    %v271 = vld [vmem:[#allocation7 + $0x70] sm:$0xff]
    %v272 = vld [vmem:[#allocation7 + $0x78] sm:$0xff]
    %v273 = vld [vmem:[%s6] sm:$0x1]
    %v275 = vlaneseq
    %v276 = vshrl.u32 %v275, 7
    %v277 = vsub.s32 0, %v276
    %v278 = vrot.slane %v273, %v277
    %280 = vmatprep.subr.mxu0 0.0
    %281 = vmatpush1.msra.mxu0 %v257
    %282 = vmatprep.subr.mxu0 0.0
    %283 = vmatpush1.msra.mxu0 %v258
    %284 = vmatprep.subr.mxu0 0.0
    %285 = vmatpush1.msra.mxu0 %v259
    %286 = vmatprep.subr.mxu0 0.0
    %287 = vmatpush1.msra.mxu0 %v260
    %288 = vmatprep.subr.mxu0 0.0
    %289 = vmatpush1.msra.mxu0 %v261
    %290 = vmatprep.subr.mxu0 0.0
    %291 = vmatpush1.msra.mxu0 %v262
    %292 = vmatprep.subr.mxu0 0.0
    %293 = vmatpush1.msra.mxu0 %v263
    %294 = vmatprep.subr.mxu0 0.0
    %295 = vmatpush1.msra.mxu0 %v264
    %296 = vmatprep.subr.mxu0 0.0
    %297 = vmatpush1.msra.mxu0 %v265
    %298 = vmatprep.subr.mxu0 0.0
    %299 = vmatpush1.msra.mxu0 %v266
    %300 = vmatprep.subr.mxu0 0.0
    %301 = vmatpush1.msra.mxu0 %v267
    %302 = vmatprep.subr.mxu0 0.0
    %303 = vmatpush1.msra.mxu0 %v268
    %304 = vmatprep.subr.mxu0 0.0
    %305 = vmatpush1.msra.mxu0 %v269
    %306 = vmatprep.subr.mxu0 0.0
    %307 = vmatpush1.msra.mxu0 %v270
    %308 = vmatprep.subr.mxu0 0.0
    %309 = vmatpush1.msra.mxu0 %v271
    %310 = vmatprep.subr.mxu0 0.0
    %311 = vmatpush1.msra.mxu0 %v272
    %312 = vmatprep.subr.mxu0 0.0
    %313 = vmatpush1.msra.mxu0 0.0
    %314 = vmatprep.subr.mxu0 0.0
    %315 = vmatpush1.msra.mxu0 0.0
    %316 = vmatprep.subr.mxu0 0.0
    %317 = vmatpush1.msra.mxu0 0.0
    %318 = vmatprep.subr.mxu0 0.0
    %319 = vmatpush1.msra.mxu0 0.0
    %320 = vmatprep.subr.mxu0 0.0
    %321 = vmatpush1.msra.mxu0 0.0
    %322 = vmatprep.subr.mxu0 0.0
    %323 = vmatpush1.msra.mxu0 0.0
    %324 = vmatprep.subr.mxu0 0.0
    %325 = vmatpush1.msra.mxu0 0.0
    %326 = vmatprep.subr.mxu0 0.0
    %327 = vmatpush1.msra.mxu0 0.0
    %328 = vmatprep.subr.mxu0 0.0
    %329 = vmatpush1.msra.mxu0 0.0
    %330 = vmatprep.subr.mxu0 0.0
    %331 = vmatpush1.msra.mxu0 0.0
    %332 = vmatprep.subr.mxu0 0.0
    %333 = vmatpush1.msra.mxu0 0.0
    %334 = vmatprep.subr.mxu0 0.0
    %335 = vmatpush1.msra.mxu0 0.0
    %336 = vmatprep.subr.mxu0 0.0
    %337 = vmatpush1.msra.mxu0 0.0
    %338 = vmatprep.subr.mxu0 0.0
    %339 = vmatpush1.msra.mxu0 0.0
    %340 = vmatprep.subr.mxu0 0.0
    %341 = vmatpush1.msra.mxu0 0.0
    %342 = vmatprep.subr.mxu0 0.0
    %343 = vmatpush1.msra.mxu0 0.0
    %344 = vmatprep.mubr.f32.mxu0 0.0
    %345 = vmatmul.mubr.f32.gmra.mrb[0].mxu0 %v256
    %v346 = vpop.f32.mrb[0].mxu0
    %v347 = vadd.f32 %v278, %v346
    %v348 = vpop.f32.mrb[0].mxu0
    %349 = vdwg.mxu0
    %350 = vst [vmem:[#allocation8] sm:$0xff] %v347
    // Predicated region
    $region42: #{fwd.1} parent=1 // pred_check
      _
    $region43: #{fwd.1} parent=1 // pred_check_branch
      %352 = sbr.rel (0) target = $region45
    $region44: #{fwd.1} parent=1 // pred_region
      %s354 = ssub.s32 128, 128
      %355 = vsyncadd [#allocation4], %s354
      %s357 = sshll.u32 [#allocation8], 4
      %s358 = int_to_ptr.vmem [resolvable:$true] %s357
      %360 = dma.vmem_to_hbm [thread:$0]  %s358, 128, %s7, [#allocation4]
    $region45: #{fwd.1} parent=1 // pred_fallthru
      _
    // Predicated region
    $region46: #{fwd.1} parent=1 // pred_check
      _
    $region47: #{fwd.1} parent=1 // pred_check_branch
      %362 = sbr.rel (0) target = $region49
    $region48: #{fwd.1} parent=1 // pred_region
      %363 = dma.done [#allocation4], 128
    $region49: #{fwd.1} parent=1 // pred_fallthru
      _
    %364 = vsyncpa [#allocation3], 1
    %365 = vsyncpa [#allocation6], 1
    %366 = vsyncpa [#allocation4], 1

</llo_original>
